<compile_context>
chip_gen: v5e
topology: v5e:2x2
jax: 0.10.0
libtpu: 0.0.40
codegen_flags: <defaults>
</compile_context>

<pallas_src>
import functools

import jax
import jax.numpy as jnp
from jax.experimental import pallas as pl
from jax.experimental.pallas import tpu as pltpu


# ----------------------------- kernel ---------------------------------------


def _head_kernel(x_ref, w_ref, b_ref, o_ref, *, apply_sigmoid: bool):
    # x_ref: (TB, H)  w_ref: (H, TO)  b_ref: (1, TO)  o_ref: (TB, TO)
    y = jnp.dot(x_ref[...], w_ref[...], preferred_element_type=jnp.float32)
    y = y + b_ref[...].astype(jnp.float32)
    if apply_sigmoid:  # static branch: (not regression) & (num_outputs == 1)
        y = jax.nn.sigmoid(y)
    o_ref[...] = y.astype(o_ref.dtype)


# ----------------------------- tiling helpers --------------------------------


def _round_up(v: int, m: int) -> int:
    return ((v + m - 1) // m) * m


def _round_down(v: int, m: int) -> int:
    return (v // m) * m


def _sublane(itemsize: int) -> int:
    # Native second-minor tiling: f32 -> 8 rows, bf16 -> 16, int8/fp8 -> 32.
    return max(8, 32 // max(1, itemsize))


def _vmem_capacity_bytes() -> int:
    try:
        info = pltpu.get_tpu_info()
        return int(getattr(info, "vmem_capacity_bytes", 64 << 20))
    except Exception:
        return 64 << 20  # conservative: v7x per-TC VMEM


def _choose_tile_b(B: int, H: int, itemsize: int, per_buffer_budget: int) -> int:
    """Batch tile: sublane-aligned, capped by BYTES only, and yielding >=2 grid steps
    whenever the batch allows (pipelining + v7x two-TensorCore sharding)."""
    sub = _sublane(itemsize)
    if B <= sub:
        return B  # single full-extent block (allowed: equals full array dim)
    rows = max(sub, per_buffer_budget // max(1, H * itemsize))
    tile = min(_round_down(rows, sub), _round_up(B, sub))
    tile = max(sub, tile)
    if pl.cdiv(B, tile) < 2:
        half = _round_up(pl.cdiv(B, 2), sub)
        tile = max(sub, min(tile, half))
    return tile


def _choose_tile_o(O: int, H: int, itemsize: int, budget: int = 8 << 20) -> int:
    """Output-column tile for wide heads: multiple of 128 so the weight/output blocks stay
    lane-dense and the double-buffered weight fits ~budget bytes. Small O -> full extent."""
    if O <= 128:
        return O
    max_cols = _round_down(budget // max(1, 2 * H * itemsize), 128)
    if max_cols < 128 or max_cols >= O:
        return O
    return min(max_cols, 512)


# ----------------------------- wrapper ---------------------------------------


def finetuning_head(
    x,
    weight,
    bias,
    *,
    regression: bool,
    tile_b: int | None = None,
    use_pallas: bool | None = None,
    weight_is_pre_transposed: bool = False,
):
    """Pallas implementation of FinetuningHead.forward.

    x:      (B, H)
    weight: (O, H)  PyTorch nn.Linear layout (or (H, O) if weight_is_pre_transposed)
    bias:   (O,)
    """
    B, H = x.shape
    if weight_is_pre_transposed:
        weight_t = weight  # (H, O) already
        O = weight.shape[1]
    else:
        O = weight.shape[0]
        # One-time transpose; hoist to parameter-preparation time for repeated calls.
        weight_t = weight.T  # (H, O)

    apply_sigmoid = (not regression) and (O == 1)
    bias2d = bias.reshape(1, O)

    xi = x.dtype.itemsize
    wi = weight_t.dtype.itemsize
    bi = bias2d.dtype.itemsize
    oi = xi  # output follows x.dtype

    # Tiny-problem fallback: XLA's fused GEMV beats a single non-pipelined grid step.
    if use_pallas is None:
        use_pallas = (B * H * xi + H * O * wi) >= (2 << 20)
    if not use_pallas:
        y = jnp.dot(x, weight_t, preferred_element_type=jnp.float32) + bias2d
        if apply_sigmoid:
            y = jax.nn.sigmoid(y)
        return y.astype(x.dtype)

    # Generation-aware per-buffer budget for the double-buffered x stream.
    vmem = _vmem_capacity_bytes()
    per_buf_budget = (16 << 20) if vmem >= (128 << 20) else (10 << 20)

    if tile_b is None:
        tile_b = _choose_tile_b(B, H, xi, per_buf_budget)
    tile_o = _choose_tile_o(O, H, wi)

    nb = pl.cdiv(B, tile_b)   # ragged last block handled by the pipeline, no jnp.pad
    no = pl.cdiv(O, tile_o)

    kernel = functools.partial(_head_kernel, apply_sigmoid=apply_sigmoid)

    cost = pl.CostEstimate(
        flops=2 * B * H * O,
        transcendentals=(B * O if apply_sigmoid else 0),
        bytes_accessed=B * H * xi + nb * H * O * wi + O * bi + B * O * oi,
    )

    # Double-buffered VMEM footprint (+ headroom for internal scratch), clamped to chip VMEM.
    needed = 2 * (
        tile_b * H * xi
        + H * tile_o * wi
        + max(tile_o, 128) * bi
        + tile_b * max(tile_o, 128) * oi
    )
    vmem_limit = min(max(32 << 20, needed + (8 << 20)), max(32 << 20, vmem - (8 << 20)))

    out = pl.pallas_call(
        kernel,
        out_shape=jax.ShapeDtypeStruct((B, O), x.dtype),
        grid_spec=pltpu.PrefetchScalarGridSpec(
            num_scalar_prefetch=0,
            grid=(nb, no),
            in_specs=[
                pl.BlockSpec((tile_b, H), lambda i, j: (i, 0)),      # x tile (streamed once)
                pl.BlockSpec((H, tile_o), lambda i, j: (0, j)),      # weight column tile
                pl.BlockSpec((1, tile_o), lambda i, j: (0, j)),      # bias tile
            ],
            out_specs=pl.BlockSpec((tile_b, tile_o), lambda i, j: (i, j)),
        ),
        compiler_params=pltpu.CompilerParams(
            dimension_semantics=("parallel", "parallel"),  # batch axis shards across TCs
            vmem_limit_bytes=int(vmem_limit),
        ),
        cost_estimate=cost,
    )(x, weight_t, bias2d)

    return out


# ----------------------------- self-test --------------------------------------


if __name__ == "__main__":
    key = jax.random.PRNGKey(0)
    kx, kw, kb, kx2 = jax.random.split(key, 4)

    batch = 8
    hidden_size = 32
    num_outputs = 1  # exercises the sigmoid branch (regression=False)

    x = jax.random.normal(kx, (batch, hidden_size), dtype=jnp.float32)
    bound = 1.0 / (hidden_size ** 0.5)
    weight = jax.random.uniform(kw, (num_outputs, hidden_size),
                                minval=-bound, maxval=bound, dtype=jnp.float32)
    bias = jax.random.uniform(kb, (num_outputs,),
                              minval=-bound, maxval=bound, dtype=jnp.float32)

    # Sigmoid path; force the Pallas kernel (auto mode would route this tiny case to XLA).
    out = jax.block_until_ready(
        finetuning_head(x, weight, bias, regression=False, use_pallas=True))
    ref = jax.nn.sigmoid(x @ weight.T + bias)
    assert out.shape == (batch, num_outputs)
    assert jnp.allclose(out, ref, atol=1e-5, rtol=1e-5)

    # No-sigmoid (regression / multi-output) path.
    num_outputs2 = 4
    w2 = jax.random.uniform(kw, (num_outputs2, hidden_size),
                            minval=-bound, maxval=bound, dtype=jnp.float32)
    b2 = jax.random.uniform(kb, (num_outputs2,),
                            minval=-bound, maxval=bound, dtype=jnp.float32)
    out2 = jax.block_until_ready(
        finetuning_head(x, w2, b2, regression=True, use_pallas=True))
    ref2 = x @ w2.T + b2
    assert out2.shape == (batch, num_outputs2)
    assert jnp.allclose(out2, ref2, atol=1e-5, rtol=1e-5)

    # Ragged batch (not a multiple of the tile): exercises the cdiv grid with no jnp.pad copy.
    B3, H3 = 200, 128
    x3 = jax.random.normal(kx2, (B3, H3), dtype=jnp.float32)
    w3 = jax.random.uniform(kw, (1, H3), minval=-bound, maxval=bound, dtype=jnp.float32)
    b3 = jax.random.uniform(kb, (1,), minval=-bound, maxval=bound, dtype=jnp.float32)
    out3 = jax.block_until_ready(
        finetuning_head(x3, w3, b3, regression=False, use_pallas=True))
    ref3 = jax.nn.sigmoid(x3 @ w3.T + b3)
    assert out3.shape == (B3, 1)
    assert jnp.allclose(out3, ref3, atol=1e-5, rtol=1e-5)

    # Auto mode (tiny problem -> plain-XLA fallback) must agree with the kernel path.
    out4 = jax.block_until_ready(finetuning_head(x, weight, bias, regression=False))
    assert jnp.allclose(out4, ref, atol=1e-5, rtol=1e-5)

    print("KERNEL_OK")
</pallas_src>

<mosaic_0001>
module attributes {stable_mosaic.version = 11 : i64} {
  func.func @_head_kernel(%arg0: i32, %arg1: i32, %arg2: memref<8x32xf32, #tpu.memory_space<vmem>>, %arg3: memref<32x1xf32, #tpu.memory_space<vmem>>, %arg4: memref<1x1xf32, #tpu.memory_space<vmem>>, %arg5: memref<8x1xf32, #tpu.memory_space<vmem>>) attributes {dimension_semantics = [#tpu.dimension_semantics<parallel>, #tpu.dimension_semantics<parallel>], iteration_bounds = array<i64: 1, 1>, scalar_prefetch = 0 : i64, scratch_operands = 0 : i64, tpu.core_type = #tpu.core_type<tc>, window_params = [{transform_indices = @transform_0, window_bounds = array<i64: 8, 32>}, {transform_indices = @transform_1, window_bounds = array<i64: 32, 1>}, {transform_indices = @transform_2, window_bounds = array<i64: 1, 1>}, {transform_indices = @transform_3, window_bounds = array<i64: 8, 1>}]} {
    %c0 = arith.constant 0 : index
    %c0_0 = arith.constant 0 : index
    %0 = vector.load %arg2[%c0, %c0_0] : memref<8x32xf32, #tpu.memory_space<vmem>>, vector<8x32xf32>
    %c0_1 = arith.constant 0 : index
    %c0_2 = arith.constant 0 : index
    %1 = vector.load %arg3[%c0_1, %c0_2] : memref<32x1xf32, #tpu.memory_space<vmem>>, vector<32x1xf32>
    %cst = arith.constant dense<0.000000e+00> : vector<8x1xf32>
    %2 = tpu.matmul %0, %1, %cst {dimension_numbers = #tpu.dot_dimension_numbers<[1], [0], [0], [1], [0, 0, 1, 1], [], []>} : vector<8x32xf32>, vector<32x1xf32>, vector<8x1xf32> -> vector<8x1xf32>
    %c0_3 = arith.constant 0 : index
    %c0_4 = arith.constant 0 : index
    %3 = vector.load %arg4[%c0_3, %c0_4] : memref<1x1xf32, #tpu.memory_space<vmem>>, vector<1x1xf32>
    %4 = vector.broadcast %3 : vector<1x1xf32> to vector<8x1xf32>
    %5 = arith.addf %2, %4 : vector<8x1xf32>
    %6 = arith.negf %5 : vector<8x1xf32>
    %7 = math.exp %6 : vector<8x1xf32>
    %cst_5 = arith.constant 1.000000e+00 : f32
    %8 = vector.broadcast %cst_5 : f32 to vector<8x1xf32>
    %9 = arith.addf %8, %7 : vector<8x1xf32>
    %10 = arith.divf %8, %9 : vector<8x1xf32>
    %c0_6 = arith.constant 0 : index
    %c0_7 = arith.constant 0 : index
    %11 = vector.load %arg5[%c0_6, %c0_7] : memref<8x1xf32, #tpu.memory_space<vmem>>, vector<8x1xf32>
    tpu.vector_store %arg5[%c0_6, %c0_7], %10 {strides = array<i32>} : memref<8x1xf32, #tpu.memory_space<vmem>>, vector<8x1xf32>,
    return
  }
  func.func @transform_0(%arg0: i32, %arg1: i32) -> (i32, i32) {
    %c0_i32 = arith.constant 0 : i32
    %c0_i32_0 = arith.constant 0 : i32
    return %arg0, %c0_i32 : i32, i32
  }
  func.func @transform_1(%arg0: i32, %arg1: i32) -> (i32, i32) {
    %c0_i32 = arith.constant 0 : i32
    %c0_i32_0 = arith.constant 0 : i32
    return %c0_i32, %arg1 : i32, i32
  }
  func.func @transform_2(%arg0: i32, %arg1: i32) -> (i32, i32) {
    %c0_i32 = arith.constant 0 : i32
    %c0_i32_0 = arith.constant 0 : i32
    return %c0_i32, %arg1 : i32, i32
  }
  func.func @transform_3(%arg0: i32, %arg1: i32) -> (i32, i32) {
    %c0_i32 = arith.constant 0 : i32
    return %arg0, %arg1 : i32, i32
  }
}

</mosaic_0001>

<llo_original>
// kernel: tpu_custom_call.1
$region0: #{tpu_custom_call.1}
  #allocation0 [shape = 'u32[]', space=smem, size = 0x4, offset = 0x4, fixed_abs, tag = 'smem constant byte address 0x4 - core index']
  #allocation1 [shape = 'u32[72,128]{1,0:T(1,128)}', space=vmem, size = 0x9000, scoped, tag = 'internal scratch']
  #allocation2 [shape = 'f32[1,1]{1,0:T(1,128)S(1)}', space=vmem, size = 0x200, scoped, tag = 'scoped memory for tpu_custom_call.1']
  %s0 = inlined_call_operand.vmem [shape: f32[8,32], index: 0, kind: input, shape index: {}]
  %s1 = inlined_call_operand.vmem [shape: f32[32,1], index: 1, kind: input, shape index: {}]
  %s2 = inlined_call_operand.<no memory space> [shape: f32[1,1], index: 2, kind: input, shape index: {}]
  %s3 = inlined_call_operand.vmem [shape: f32[8,1], index: 3, kind: output, shape index: {}]
  %s4 = sld [smem:[#allocation0]]
  $region22: #{tpu_custom_call.1} parent=0
    _
  %s6 = ssub.s32 1, %s4
  %s7 = scalar_select 0, %s6, %s4
  %v8 = vstv %s2
  %9 = vst [vmem:[#allocation2] sm:$0x1] %v8
  // Predicated region
  $region2: #{tpu_custom_call.1} parent=0 // pred_check
    _
  $region3: #{tpu_custom_call.1} parent=0 // pred_check_branch
    %11 = sbr.rel (0) target = $region5
  $region4: #{tpu_custom_call.1} parent=0 // pred_region
    _
  $region5: #{tpu_custom_call.1} parent=0 // pred_fallthru
    _
  // Predicated region
  $region6: #{tpu_custom_call.1} parent=0 // pred_check
    _
  $region7: #{tpu_custom_call.1} parent=0 // pred_check_branch
    %13 = sbr.rel (0) target = $region9
  $region8: #{tpu_custom_call.1} parent=0 // pred_region
    _
  $region9: #{tpu_custom_call.1} parent=0 // pred_fallthru
    _
  // Predicated region
  $region10: #{tpu_custom_call.1} parent=0 // pred_check
    _
  $region11: #{tpu_custom_call.1} parent=0 // pred_check_branch
    %15 = sbr.rel (0) target = $region13
  $region12: #{tpu_custom_call.1} parent=0 // pred_region
    _
  $region13: #{tpu_custom_call.1} parent=0 // pred_fallthru
    _
  %v16 = vld [vmem:[%s0] sm:$0xff]
  %v17 = vld [vmem:[%s1] sm:$0xff]
  %v18 = vld [vmem:[%s1 + $0x8] sm:$0xff]
  %v19 = vld [vmem:[%s1 + $0x10] sm:$0xff]
  %v20 = vld [vmem:[%s1 + $0x18] sm:$0xff]
  %v21 = vld [vmem:[#allocation2] sm:$0x1]
  %v23 = vperm.slane %v21, 0
  %vm25 = vcmask 261120
  %v27 = vsel %vm25, %v16, 0
  %29 = vmatpush.msra.mxu0 0.0
  %30 = vmatpush.msra.mxu0 0.0
  %31 = vmatpush.msra.mxu0 0.0
  %32 = vmatpush.msra.mxu0 0.0
  %33 = vmatpush.msra.mxu0 0.0
  %34 = vmatpush.msra.mxu0 0.0
  %35 = vmatpush.msra.mxu0 0.0
  %36 = vmatpush.msra.mxu0 0.0
  %37 = vmatpush.msra.mxu0 0.0
  %38 = vmatpush.msra.mxu0 0.0
  %39 = vmatpush.msra.mxu0 0.0
  %40 = vmatpush.msra.mxu0 0.0
  %41 = vmatpush.msra.mxu0 %v20
  %42 = vmatpush.msra.mxu0 %v19
  %43 = vmatpush.msra.mxu0 %v18
  %44 = vmatpush.msra.mxu0 %v17
  %45 = vmatmul.f32.gmra.mxu0 %v27
  %v46 = vpop.f32.mrf.mxu0
  %v47 = vadd.f32 %v23, %v46
  %48 = vdwg.mxu0
  %v49 = vxor.u32 %v47, 2147483648
  %v50 = vmul.f32 %v49, 1.442695
  %v51 = vpow.pop %v50
  %v52 = vadd.f32 %v51, 1.0
  %v53 = vrcp.pop %v52
  %v54 = vmul.f32 %v52, %v53
  %v55 = vsub.f32 1.0, %v54
  %v56 = vmul.f32 %v53, %v55
  %v57 = vadd.f32 %v53, %v56
  %vm58 = vweird.f32 %v52
  %vm59 = vweird.f32 %v53
  %vm60 = vmor %vm58, %vm59
  %v61 = vsel %vm60, %v53, %v57
  %v62 = vand.u32 2147483647, %v52
  %vm63 = vcmp.eq.f32.partialorder %v62, 8.507059e+37
  %v64 = vand.u32 %v52, 2147483648
  %v65 = vor.u32 1.1754944e-38, %v64
  %v66 = vsel %vm63, %v65, %v61
  %v67 = vmul.f32 1.0, %v66
  %vm68 = vcmask 7168
  %69 = vst.msk [vmem:[%s3] sm:$0xff] %vm68, %v67
  // Predicated region
  $region14: #{tpu_custom_call.1} parent=0 // pred_check
    _
  $region15: #{tpu_custom_call.1} parent=0 // pred_check_branch
    %71 = sbr.rel (0) target = $region17
  $region16: #{tpu_custom_call.1} parent=0 // pred_region
    _
  $region17: #{tpu_custom_call.1} parent=0 // pred_fallthru
    _
  // Predicated region
  $region18: #{tpu_custom_call.1} parent=0 // pred_check
    _
  $region19: #{tpu_custom_call.1} parent=0 // pred_check_branch
    %73 = sbr.rel (0) target = $region21
  $region20: #{tpu_custom_call.1} parent=0 // pred_region
    _
  $region21: #{tpu_custom_call.1} parent=0 // pred_fallthru
    _

</llo_original>
